<compile_context>
chip_gen: v7x
topology: tpu7x:2x2x1
jax: 0.10.0
libtpu: 0.0.40
codegen_flags: <defaults>
</compile_context>

<pallas_src>
import functools

import jax
import jax.numpy as jnp
from jax.experimental import pallas as pl
from jax.experimental.pallas import tpu as pltpu


def _round_up(x, m):
    return (x + m - 1) // m * m


# --------------------------------------------------------------------------- #
# Kernel
# --------------------------------------------------------------------------- #
def _fc_kernel(num_layers, compute_dtype,
               x_ref, w_in_ref, b_in_ref,
               wh_ref, bh_ref,
               w_out_ref, b_out_ref,
               out_ref):
    # BatchNorm already folded into (w_in, b_in) at param-prep time.
    # linear_in: bf16 x bf16 on the MXU, f32 accumulation.
    h = jnp.dot(x_ref[...], w_in_ref[...],
                preferred_element_type=jnp.float32) + b_in_ref[...]

    # hidden layers: relu(dropout(linear(h)))  (dropout = identity in eval)
    for i in range(num_layers):
        h = jnp.dot(h.astype(compute_dtype), wh_ref[i],
                    preferred_element_type=jnp.float32) + bh_ref[i]
        h = jnp.maximum(h, 0.0)

    # linear_out
    out = jnp.dot(h.astype(compute_dtype), w_out_ref[...],
                  preferred_element_type=jnp.float32) + b_out_ref[...]
    out_ref[...] = out.astype(out_ref.dtype)


# --------------------------------------------------------------------------- #
# Parameter prep: fold BN, pad to 128 lanes, cast weights to bf16
# --------------------------------------------------------------------------- #
def prepare_params(params, compute_dtype=jnp.bfloat16):
    bn_scale, bn_shift = params["bn_scale"], params["bn_shift"]   # [1, D_in]
    w_in, b_in = params["w_in"], params["b_in"]                   # [D_in, H], [1, H]
    wh, bh = params["w_hidden"], params["b_hidden"]               # [L, H, H], [L, 1, H]
    w_out, b_out = params["w_out"], params["b_out"]               # [H, D_out], [1, D_out]

    # Fold eval-mode BN affine into linear_in:
    #   (x * s + t) @ W + b  ==  x @ (s.T * W) + (t @ W + b)
    w_in_f = bn_scale.reshape(-1, 1) * w_in
    b_in_f = bn_shift @ w_in + b_in

    D_in, H = w_in.shape
    D_out = w_out.shape[1]
    L = wh.shape[0]
    D_in_p = _round_up(D_in, 128)
    H_p = _round_up(H, 128)
    D_out_p = _round_up(D_out, 128)

    def pad(a, shape):
        return jnp.pad(a, [(0, s - d) for d, s in zip(a.shape, shape)])

    return dict(
        w_in=pad(w_in_f, (D_in_p, H_p)).astype(compute_dtype),
        b_in=pad(b_in_f, (1, H_p)).astype(jnp.float32),
        w_hidden=pad(wh, (L, H_p, H_p)).astype(compute_dtype),
        b_hidden=pad(bh, (L, 1, H_p)).astype(jnp.float32),
        w_out=pad(w_out, (H_p, D_out_p)).astype(compute_dtype),
        b_out=pad(b_out, (1, D_out_p)).astype(jnp.float32),
        compute_dtype=compute_dtype,
        dims=(D_in, H, D_out, D_in_p, H_p, D_out_p, L),
    )


# --------------------------------------------------------------------------- #
# Wrapper
# --------------------------------------------------------------------------- #
def fully_connected_forward(x, prep, *, batch_tile=128):
    D_in, H, D_out, D_in_p, H_p, D_out_p, L = prep["dims"]
    compute_dtype = prep["compute_dtype"]
    N = x.shape[0]

    # Batch tile: multiple of 8 sublanes; 128 rows per step once N is big enough.
    tn = batch_tile if N >= batch_tile else _round_up(N, 8)
    N_p = _round_up(N, tn)

    x_p = jnp.pad(x, ((0, N_p - N), (0, D_in_p - D_in))).astype(compute_dtype)

    grid = (N_p // tn,)
    const2 = lambda i: (0, 0)
    const3 = lambda i: (0, 0, 0)
    in_specs = [
        pl.BlockSpec((tn, D_in_p), lambda i: (i, 0)),       # x tile (pipelined)
        pl.BlockSpec((D_in_p, H_p), const2),                # resident weights
        pl.BlockSpec((1, H_p), const2),
        pl.BlockSpec((L, H_p, H_p), const3),
        pl.BlockSpec((L, 1, H_p), const3),
        pl.BlockSpec((H_p, D_out_p), const2),
        pl.BlockSpec((1, D_out_p), const2),
    ]
    out_specs = pl.BlockSpec((tn, D_out_p), lambda i: (i, 0))

    # Advisory cost estimate for the XLA scheduler.
    w_bytes = ((prep["w_in"].size + prep["w_hidden"].size + prep["w_out"].size) * 2
               + (prep["b_in"].size + prep["b_hidden"].size + prep["b_out"].size) * 4)
    flops = 2 * N_p * (D_in_p * H_p + L * H_p * H_p + H_p * D_out_p)
    bytes_accessed = w_bytes + x_p.size * 2 + N_p * D_out_p * 4

    # Explicit VMEM budget (important on v7x: 64 MiB physical, 32 MiB default scoped).
    block_bytes = tn * D_in_p * 2 + tn * D_out_p * 4 + w_bytes
    act_bytes = tn * max(D_in_p, H_p, D_out_p) * 4 * (L + 3)
    vmem_limit = int(min(max(2 * block_bytes + act_bytes + (4 << 20), 16 << 20),
                         64 << 20))

    out = pl.pallas_call(
        functools.partial(_fc_kernel, L, compute_dtype),
        out_shape=jax.ShapeDtypeStruct((N_p, D_out_p), jnp.float32),
        grid=grid,
        in_specs=in_specs,
        out_specs=out_specs,
        compiler_params=pltpu.CompilerParams(
            dimension_semantics=("parallel",),
            vmem_limit_bytes=vmem_limit),
        cost_estimate=pl.CostEstimate(flops=flops, transcendentals=0,
                                      bytes_accessed=bytes_accessed),
    )(x_p, prep["w_in"], prep["b_in"], prep["w_hidden"], prep["b_hidden"],
      prep["w_out"], prep["b_out"])

    return out[:N, :D_out]


# --------------------------------------------------------------------------- #
# Parameter init (matches torch defaults) and pure-JAX reference
# --------------------------------------------------------------------------- #
def init_params(key, D_in, H, D_out, num_layers):
    ks = jax.random.split(key, 2 + num_layers)
    # BatchNorm1d defaults: gamma=1, beta=0, running_mean=0, running_var=1, eps=1e-5
    gamma = jnp.ones((1, D_in), jnp.float32)
    beta = jnp.zeros((1, D_in), jnp.float32)
    running_mean = jnp.zeros((1, D_in), jnp.float32)
    running_var = jnp.ones((1, D_in), jnp.float32)
    eps = 1e-5
    bn_scale = gamma / jnp.sqrt(running_var + eps)
    bn_shift = beta - running_mean * bn_scale

    def lin(k, fan_in, fan_out):
        # weights stored as [in, out] (pre-transposed vs torch's [out, in])
        bound = 1.0 / jnp.sqrt(fan_in)
        kw, kb = jax.random.split(k)
        w = jax.random.uniform(kw, (fan_in, fan_out), jnp.float32, -bound, bound)
        b = jax.random.uniform(kb, (1, fan_out), jnp.float32, -bound, bound)
        return w, b

    w_in, b_in = lin(ks[0], D_in, H)
    wh, bh = [], []
    for i in range(num_layers):
        w, b = lin(ks[1 + i], H, H)
        wh.append(w)
        bh.append(b)
    w_out, b_out = lin(ks[1 + num_layers], H, D_out)

    return dict(
        bn_scale=bn_scale, bn_shift=bn_shift,
        w_in=w_in, b_in=b_in,
        w_hidden=jnp.stack(wh, axis=0),               # [L, H, H]
        b_hidden=jnp.stack(bh, axis=0),               # [L, 1, H]
        w_out=w_out, b_out=b_out,
    )


def reference_forward(x, params, num_layers):
    h = x * params["bn_scale"] + params["bn_shift"]
    h = h @ params["w_in"] + params["b_in"]
    for i in range(num_layers):
        h = jnp.maximum(h @ params["w_hidden"][i] + params["b_hidden"][i], 0.0)
    return h @ params["w_out"] + params["b_out"]


if __name__ == "__main__":
    N, D_in, H, D_out = 8, 16, 32, 8
    NUM_LAYERS = 2  # c.Num_layers

    key = jax.random.PRNGKey(0)
    kx, kp = jax.random.split(key)
    x = jax.random.normal(kx, (N, D_in), jnp.float32)
    params = init_params(kp, D_in, H, D_out, NUM_LAYERS)
    prep = prepare_params(params)

    out = jax.block_until_ready(fully_connected_forward(x, prep))

    ref = reference_forward(x, params, NUM_LAYERS)
    assert out.shape == (N, D_out)
    # bf16 MXU operands with f32 accumulation -> loose tolerance vs f32 reference.
    assert jnp.allclose(out, ref, atol=5e-2, rtol=5e-2), \
        float(jnp.max(jnp.abs(out - ref)))
    print("KERNEL_OK")
</pallas_src>

<mosaic_0001>
module attributes {stable_mosaic.version = 11 : i64} {
  func.func @_fc_kernel(%arg0: i32, %arg1: memref<8x128xbf16, #tpu.memory_space<vmem>>, %arg2: memref<128x128xbf16, #tpu.memory_space<vmem>>, %arg3: memref<1x128xf32, #tpu.memory_space<vmem>>, %arg4: memref<2x128x128xbf16, #tpu.memory_space<vmem>>, %arg5: memref<2x1x128xf32, #tpu.memory_space<vmem>>, %arg6: memref<128x128xbf16, #tpu.memory_space<vmem>>, %arg7: memref<1x128xf32, #tpu.memory_space<vmem>>, %arg8: memref<8x128xf32, #tpu.memory_space<vmem>>) attributes {dimension_semantics = [#tpu.dimension_semantics<parallel>], iteration_bounds = array<i64: 1>, scalar_prefetch = 0 : i64, scratch_operands = 0 : i64, tpu.core_type = #tpu.core_type<tc>, window_params = [{transform_indices = @transform_0, window_bounds = array<i64: 8, 128>}, {pipeline_mode = #tpu.pipeline_mode<synchronous>, transform_indices = @transform_1, window_bounds = array<i64: 128, 128>}, {pipeline_mode = #tpu.pipeline_mode<synchronous>, transform_indices = @transform_2, window_bounds = array<i64: 1, 128>}, {pipeline_mode = #tpu.pipeline_mode<synchronous>, transform_indices = @transform_3, window_bounds = array<i64: 2, 128, 128>}, {pipeline_mode = #tpu.pipeline_mode<synchronous>, transform_indices = @transform_4, window_bounds = array<i64: 2, 1, 128>}, {pipeline_mode = #tpu.pipeline_mode<synchronous>, transform_indices = @transform_5, window_bounds = array<i64: 128, 128>}, {pipeline_mode = #tpu.pipeline_mode<synchronous>, transform_indices = @transform_6, window_bounds = array<i64: 1, 128>}, {transform_indices = @transform_7, window_bounds = array<i64: 8, 128>}]} {
    %c0 = arith.constant 0 : index
    %c0_0 = arith.constant 0 : index
    %0 = vector.load %arg1[%c0, %c0_0] : memref<8x128xbf16, #tpu.memory_space<vmem>>, vector<8x128xbf16>
    %c0_1 = arith.constant 0 : index
    %c0_2 = arith.constant 0 : index
    %1 = vector.load %arg2[%c0_1, %c0_2] : memref<128x128xbf16, #tpu.memory_space<vmem>>, vector<128x128xbf16>
    %cst = arith.constant dense<0.000000e+00> : vector<8x128xf32>
    %2 = tpu.matmul %0, %1, %cst {dimension_numbers = #tpu.dot_dimension_numbers<[1], [0], [0], [1], [0, 0, 1, 1], [], []>} : vector<8x128xbf16>, vector<128x128xbf16>, vector<8x128xf32> -> vector<8x128xf32>
    %c0_3 = arith.constant 0 : index
    %c0_4 = arith.constant 0 : index
    %3 = vector.load %arg3[%c0_3, %c0_4] : memref<1x128xf32, #tpu.memory_space<vmem>>, vector<1x128xf32>
    %4 = vector.broadcast %3 : vector<1x128xf32> to vector<8x128xf32>
    %5 = arith.addf %2, %4 : vector<8x128xf32>
    %6 = arith.truncf %5 : vector<8x128xf32> to vector<8x128xbf16>
    %c0_5 = arith.constant 0 : index
    %c0_6 = arith.constant 0 : index
    %c0_7 = arith.constant 0 : index
    %7 = vector.load %arg4[%c0_5, %c0_6, %c0_7] : memref<2x128x128xbf16, #tpu.memory_space<vmem>>, vector<1x128x128xbf16>
    %8 = vector.shape_cast %7 : vector<1x128x128xbf16> to vector<128x128xbf16>
    %cst_8 = arith.constant dense<0.000000e+00> : vector<8x128xf32>
    %9 = tpu.matmul %6, %8, %cst_8 {dimension_numbers = #tpu.dot_dimension_numbers<[1], [0], [0], [1], [0, 0, 1, 1], [], []>} : vector<8x128xbf16>, vector<128x128xbf16>, vector<8x128xf32> -> vector<8x128xf32>
    %c0_9 = arith.constant 0 : index
    %c0_10 = arith.constant 0 : index
    %c0_11 = arith.constant 0 : index
    %10 = vector.load %arg5[%c0_9, %c0_10, %c0_11] : memref<2x1x128xf32, #tpu.memory_space<vmem>>, vector<1x1x128xf32>
    %11 = vector.shape_cast %10 : vector<1x1x128xf32> to vector<1x128xf32>
    %12 = vector.broadcast %11 : vector<1x128xf32> to vector<8x128xf32>
    %13 = arith.addf %9, %12 : vector<8x128xf32>
    %cst_12 = arith.constant 0.000000e+00 : f32
    %14 = vector.broadcast %cst_12 : f32 to vector<8x128xf32>
    %15 = arith.maximumf %13, %14 : vector<8x128xf32>
    %16 = arith.truncf %15 : vector<8x128xf32> to vector<8x128xbf16>
    %c1 = arith.constant 1 : index
    %c0_13 = arith.constant 0 : index
    %c0_14 = arith.constant 0 : index
    %17 = vector.load %arg4[%c1, %c0_13, %c0_14] : memref<2x128x128xbf16, #tpu.memory_space<vmem>>, vector<1x128x128xbf16>
    %18 = vector.shape_cast %17 : vector<1x128x128xbf16> to vector<128x128xbf16>
    %cst_15 = arith.constant dense<0.000000e+00> : vector<8x128xf32>
    %19 = tpu.matmul %16, %18, %cst_15 {dimension_numbers = #tpu.dot_dimension_numbers<[1], [0], [0], [1], [0, 0, 1, 1], [], []>} : vector<8x128xbf16>, vector<128x128xbf16>, vector<8x128xf32> -> vector<8x128xf32>
    %c1_16 = arith.constant 1 : index
    %c0_17 = arith.constant 0 : index
    %c0_18 = arith.constant 0 : index
    %20 = vector.load %arg5[%c1_16, %c0_17, %c0_18] : memref<2x1x128xf32, #tpu.memory_space<vmem>>, vector<1x1x128xf32>
    %21 = vector.shape_cast %20 : vector<1x1x128xf32> to vector<1x128xf32>
    %22 = vector.broadcast %21 : vector<1x128xf32> to vector<8x128xf32>
    %23 = arith.addf %19, %22 : vector<8x128xf32>
    %cst_19 = arith.constant 0.000000e+00 : f32
    %24 = vector.broadcast %cst_19 : f32 to vector<8x128xf32>
    %25 = arith.maximumf %23, %24 : vector<8x128xf32>
    %26 = arith.truncf %25 : vector<8x128xf32> to vector<8x128xbf16>
    %c0_20 = arith.constant 0 : index
    %c0_21 = arith.constant 0 : index
    %27 = vector.load %arg6[%c0_20, %c0_21] : memref<128x128xbf16, #tpu.memory_space<vmem>>, vector<128x128xbf16>
    %cst_22 = arith.constant dense<0.000000e+00> : vector<8x128xf32>
    %28 = tpu.matmul %26, %27, %cst_22 {dimension_numbers = #tpu.dot_dimension_numbers<[1], [0], [0], [1], [0, 0, 1, 1], [], []>} : vector<8x128xbf16>, vector<128x128xbf16>, vector<8x128xf32> -> vector<8x128xf32>
    %c0_23 = arith.constant 0 : index
    %c0_24 = arith.constant 0 : index
    %29 = vector.load %arg7[%c0_23, %c0_24] : memref<1x128xf32, #tpu.memory_space<vmem>>, vector<1x128xf32>
    %30 = vector.broadcast %29 : vector<1x128xf32> to vector<8x128xf32>
    %31 = arith.addf %28, %30 : vector<8x128xf32>
    %c0_25 = arith.constant 0 : index
    %c0_26 = arith.constant 0 : index
    %32 = vector.load %arg8[%c0_25, %c0_26] : memref<8x128xf32, #tpu.memory_space<vmem>>, vector<8x128xf32>
    tpu.vector_store %arg8[%c0_25, %c0_26], %31 {strides = array<i32>} : memref<8x128xf32, #tpu.memory_space<vmem>>, vector<8x128xf32>,
    return
  }
  func.func @transform_0(%arg0: i32) -> (i32, i32) {
    %c0_i32 = arith.constant 0 : i32
    %c0_i32_0 = arith.constant 0 : i32
    return %arg0, %c0_i32 : i32, i32
  }
  func.func @transform_1(%arg0: i32) -> (i32, i32) {
    %c0_i32 = arith.constant 0 : i32
    %c0_i32_0 = arith.constant 0 : i32
    %c0_i32_1 = arith.constant 0 : i32
    return %c0_i32, %c0_i32_0 : i32, i32
  }
  func.func @transform_2(%arg0: i32) -> (i32, i32) {
    %c0_i32 = arith.constant 0 : i32
    %c0_i32_0 = arith.constant 0 : i32
    %c0_i32_1 = arith.constant 0 : i32
    return %c0_i32, %c0_i32_0 : i32, i32
  }
  func.func @transform_3(%arg0: i32) -> (i32, i32, i32) {
    %c0_i32 = arith.constant 0 : i32
    %c0_i32_0 = arith.constant 0 : i32
    %c0_i32_1 = arith.constant 0 : i32
    %c0_i32_2 = arith.constant 0 : i32
    return %c0_i32, %c0_i32_0, %c0_i32_1 : i32, i32, i32
  }
  func.func @transform_4(%arg0: i32) -> (i32, i32, i32) {
    %c0_i32 = arith.constant 0 : i32
    %c0_i32_0 = arith.constant 0 : i32
    %c0_i32_1 = arith.constant 0 : i32
    %c0_i32_2 = arith.constant 0 : i32
    return %c0_i32, %c0_i32_0, %c0_i32_1 : i32, i32, i32
  }
  func.func @transform_5(%arg0: i32) -> (i32, i32) {
    %c0_i32 = arith.constant 0 : i32
    %c0_i32_0 = arith.constant 0 : i32
    %c0_i32_1 = arith.constant 0 : i32
    return %c0_i32, %c0_i32_0 : i32, i32
  }
  func.func @transform_6(%arg0: i32) -> (i32, i32) {
    %c0_i32 = arith.constant 0 : i32
    %c0_i32_0 = arith.constant 0 : i32
    %c0_i32_1 = arith.constant 0 : i32
    return %c0_i32, %c0_i32_0 : i32, i32
  }
  func.func @transform_7(%arg0: i32) -> (i32, i32) {
    %c0_i32 = arith.constant 0 : i32
    %c0_i32_0 = arith.constant 0 : i32
    return %arg0, %c0_i32 : i32, i32
  }
}

</mosaic_0001>

<llo_original>
// kernel: tpu_custom_call.1
$region0: #{tpu_custom_call.1}
  #allocation0 [shape = 'u32[]', space=smem, size = 0x4, offset = 0x4, fixed_abs, tag = 'smem constant byte address 0x4 - core index']
  #allocation1 [shape = 'u32[144,128]{1,0:T(1,128)}', space=vmem, size = 0x12000, scoped, tag = 'internal scratch']
  %s0 = inlined_call_operand.hbm [shape: bf16[8,128], index: 0, kind: input, shape index: {}]
  %s1 = inlined_call_operand.hbm [shape: bf16[128,128], index: 1, kind: input, shape index: {}]
  %s2 = inlined_call_operand.vmem [shape: f32[1,128], index: 2, kind: input, shape index: {}]
  %s3 = inlined_call_operand.hbm [shape: bf16[2,128,128], index: 3, kind: input, shape index: {}]
  %s4 = inlined_call_operand.vmem [shape: f32[2,1,128], index: 4, kind: input, shape index: {}]
  %s5 = inlined_call_operand.hbm [shape: bf16[128,128], index: 5, kind: input, shape index: {}]
  %s6 = inlined_call_operand.vmem [shape: f32[1,128], index: 6, kind: input, shape index: {}]
  %s7 = inlined_call_operand.hbm [shape: f32[8,128], index: 7, kind: output, shape index: {}]
  %s8 = sld [smem:[#allocation0]]
  $region54: #{tpu_custom_call.1} parent=0
    _
  %s10 = ssub.s32 1, %s8
  %s11 = scalar_select 0, %s10, %s8
  $region1: #{tpu_custom_call.1} parent=0
    #allocation2 [shape = 'u8[2048]{0}', space=vmem, size = 0x800, scoped, tag = 'input window, operand 0, single buffered']
    #allocation3 [shape = 's32[1]{0}', space=sflag, size = 0x4, scoped, tag = 'scoped memory for tpu_custom_call.1']
    #allocation4 [shape = 's32[1]{0}', space=sflag, size = 0x4, scoped, tag = 'scoped memory for tpu_custom_call.1']
    #allocation5 [shape = 'u8[32768]{0}', space=vmem, size = 0x8000, scoped, tag = 'input window, operand 1, single buffered']
    #allocation6 [shape = 's32[1]{0}', space=sflag, size = 0x4, scoped, tag = 'scoped memory for tpu_custom_call.1']
    #allocation7 [shape = 'u8[65536]{0}', space=vmem, size = 0x10000, scoped, tag = 'input window, operand 3, single buffered']
    #allocation8 [shape = 'u8[32768]{0}', space=vmem, size = 0x8000, scoped, tag = 'input window, operand 5, single buffered']
    #allocation9 [shape = 's32[1]{0}', space=sflag, size = 0x4, scoped, tag = 'scoped memory for tpu_custom_call.1']
    #allocation10 [shape = 'u8[4096]{0}', space=vmem, size = 0x1000, scoped, tag = 'output window, operand 0, single buffered']
    %12 = vsyncpa [#allocation3], 0
    %13 = vsyncpa [#allocation6], 0
    %14 = vsyncpa [#allocation9], 0
    %15 = vsyncpa [#allocation4], 0
    // Predicated region
    $region2: #{tpu_custom_call.1} parent=1 // pred_check
      _
    $region3: #{tpu_custom_call.1} parent=1 // pred_check_branch
      %17 = sbr.rel (0) target = $region5
    $region4: #{tpu_custom_call.1} parent=1 // pred_region
      %s19 = ssub.s32 64, 64
      %20 = vsyncadd [#allocation3], %s19
      %s22 = sshll.u32 [#allocation2], 4
      %s23 = int_to_ptr.vmem [resolvable:$true] %s22
      %25 = dma.hbm_to_vmem [thread:$0]  %s0, 64, %s23, [#allocation3]
    $region5: #{tpu_custom_call.1} parent=1 // pred_fallthru
      _
    // Predicated region
    $region6: #{tpu_custom_call.1} parent=1 // pred_check
      _
    $region7: #{tpu_custom_call.1} parent=1 // pred_check_branch
      %27 = sbr.rel (0) target = $region9
    $region8: #{tpu_custom_call.1} parent=1 // pred_region
      %s29 = ssub.s32 1024, 1024
      %30 = vsyncadd [#allocation6], %s29
      %s31 = sshll.u32 [#allocation5], 4
      %s32 = int_to_ptr.vmem [resolvable:$true] %s31
      %37 = dma.hbm_to_vmem [thread:$0]  %s1, 1024, %s32, [#allocation6], 64, 64, 4
    $region9: #{tpu_custom_call.1} parent=1 // pred_fallthru
      _
    // Predicated region
    $region10: #{tpu_custom_call.1} parent=1 // pred_check
      _
    $region11: #{tpu_custom_call.1} parent=1 // pred_check_branch
      %39 = sbr.rel (0) target = $region13
    $region12: #{tpu_custom_call.1} parent=1 // pred_region
      _
    $region13: #{tpu_custom_call.1} parent=1 // pred_fallthru
      _
    // Predicated region
    $region14: #{tpu_custom_call.1} parent=1 // pred_check
      _
    $region15: #{tpu_custom_call.1} parent=1 // pred_check_branch
      %41 = sbr.rel (0) target = $region17
    $region16: #{tpu_custom_call.1} parent=1 // pred_region
      %s43 = ssub.s32 2048, 2048
      %44 = vsyncadd [#allocation6], %s43
      %s45 = sshll.u32 [#allocation7], 4
      %s46 = int_to_ptr.vmem [resolvable:$true] %s45
      %51 = dma.hbm_to_vmem [thread:$0]  %s3, 2048, %s46, [#allocation6], 64, 64, 4
    $region17: #{tpu_custom_call.1} parent=1 // pred_fallthru
      _
    // Predicated region
    $region18: #{tpu_custom_call.1} parent=1 // pred_check
      _
    $region19: #{tpu_custom_call.1} parent=1 // pred_check_branch
      %53 = sbr.rel (0) target = $region21
    $region20: #{tpu_custom_call.1} parent=1 // pred_region
      _
    $region21: #{tpu_custom_call.1} parent=1 // pred_fallthru
      _
    // Predicated region
    $region22: #{tpu_custom_call.1} parent=1 // pred_check
      _
    $region23: #{tpu_custom_call.1} parent=1 // pred_check_branch
      %55 = sbr.rel (0) target = $region25
    $region24: #{tpu_custom_call.1} parent=1 // pred_region
      %s57 = ssub.s32 1024, 1024
      %58 = vsyncadd [#allocation9], %s57
      %s59 = sshll.u32 [#allocation8], 4
      %s60 = int_to_ptr.vmem [resolvable:$true] %s59
      %65 = dma.hbm_to_vmem [thread:$0]  %s5, 1024, %s60, [#allocation9], 64, 64, 4
    $region25: #{tpu_custom_call.1} parent=1 // pred_fallthru
      _
    // Predicated region
    $region26: #{tpu_custom_call.1} parent=1 // pred_check
      _
    $region27: #{tpu_custom_call.1} parent=1 // pred_check_branch
      %67 = sbr.rel (0) target = $region29
    $region28: #{tpu_custom_call.1} parent=1 // pred_region
      _
    $region29: #{tpu_custom_call.1} parent=1 // pred_fallthru
      _
    // Predicated region
    $region30: #{tpu_custom_call.1} parent=1 // pred_check
      _
    $region31: #{tpu_custom_call.1} parent=1 // pred_check_branch
      %69 = sbr.rel (0) target = $region33
    $region32: #{tpu_custom_call.1} parent=1 // pred_region
      %70 = dma.done [#allocation3], 64
    $region33: #{tpu_custom_call.1} parent=1 // pred_fallthru
      _
    // Predicated region
    $region34: #{tpu_custom_call.1} parent=1 // pred_check
      _
    $region35: #{tpu_custom_call.1} parent=1 // pred_check_branch
      %72 = sbr.rel (0) target = $region37
    $region36: #{tpu_custom_call.1} parent=1 // pred_region
      %73 = dma.done [#allocation6], 1024
    $region37: #{tpu_custom_call.1} parent=1 // pred_fallthru
      _
    // Predicated region
    $region38: #{tpu_custom_call.1} parent=1 // pred_check
      _
    $region39: #{tpu_custom_call.1} parent=1 // pred_check_branch
      %75 = sbr.rel (0) target = $region41
    $region40: #{tpu_custom_call.1} parent=1 // pred_region
      %76 = dma.done [#allocation6], 2048
    $region41: #{tpu_custom_call.1} parent=1 // pred_fallthru
      _
    // Predicated region
    $region42: #{tpu_custom_call.1} parent=1 // pred_check
      _
    $region43: #{tpu_custom_call.1} parent=1 // pred_check_branch
      %78 = sbr.rel (0) target = $region45
    $region44: #{tpu_custom_call.1} parent=1 // pred_region
      %79 = dma.done [#allocation9], 1024
    $region45: #{tpu_custom_call.1} parent=1 // pred_fallthru
      _
    %v81 = vld [vmem:[#allocation2] sm:$0xf]
    %v82 = vld [vmem:[#allocation5] sm:$0xf]
    %v83 = vld [vmem:[#allocation5 + $0x4] sm:$0xf]
    %v84 = vld [vmem:[#allocation5 + $0x8] sm:$0xf]
    %v85 = vld [vmem:[#allocation5 + $0xc] sm:$0xf]
    %v86 = vld [vmem:[#allocation5 + $0x10] sm:$0xf]
    %v87 = vld [vmem:[#allocation5 + $0x14] sm:$0xf]
    %v88 = vld [vmem:[#allocation5 + $0x18] sm:$0xf]
    %v89 = vld [vmem:[#allocation5 + $0x1c] sm:$0xf]
    %v90 = vld [vmem:[#allocation5 + $0x20] sm:$0xf]
    %v91 = vld [vmem:[#allocation5 + $0x24] sm:$0xf]
    %v92 = vld [vmem:[#allocation5 + $0x28] sm:$0xf]
    %v93 = vld [vmem:[#allocation5 + $0x2c] sm:$0xf]
    %v94 = vld [vmem:[#allocation5 + $0x30] sm:$0xf]
    %v95 = vld [vmem:[#allocation5 + $0x34] sm:$0xf]
    %v96 = vld [vmem:[#allocation5 + $0x38] sm:$0xf]
    %v97 = vld [vmem:[#allocation5 + $0x3c] sm:$0xf]
    %v98 = vld [vmem:[%s2] sm:$0x1]
    %v100 = vlaneseq
    %v101 = vshrl.u32 %v100, 7
    %v102 = vsub.s32 0, %v101
    %v103 = vrot.slane %v98, %v102
    %v121 = vunpack.c.l.b16 %v82
    %v122 = vunpack.c.l.b16 %v83
    %v123 = vunpack.c.l.b16 %v84
    %v124 = vunpack.c.l.b16 %v85
    %v125 = vunpack.c.l.b16 %v86
    %v126 = vunpack.c.l.b16 %v87
    %v127 = vunpack.c.l.b16 %v88
    %v128 = vunpack.c.l.b16 %v89
    %v129 = vunpack.c.l.b16 %v90
    %v130 = vunpack.c.l.b16 %v91
    %v131 = vunpack.c.l.b16 %v92
    %v132 = vunpack.c.l.b16 %v93
    %v133 = vunpack.c.l.b16 %v94
    %v134 = vunpack.c.l.b16 %v95
    %v135 = vunpack.c.l.b16 %v96
    %v136 = vunpack.c.l.b16 %v97
    %v137 = vpack.c.b16 %v122, %v121
    %v138 = vpack.c.b16 %v124, %v123
    %v139 = vpack.c.b16 %v126, %v125
    %v140 = vpack.c.b16 %v128, %v127
    %v141 = vpack.c.b16 %v130, %v129
    %v142 = vpack.c.b16 %v132, %v131
    %v143 = vpack.c.b16 %v134, %v133
    %v144 = vpack.c.b16 %v136, %v135
    %153 = vmatprep.subr.bf16.mxu0 0
    %154 = vmatpush1.bf16.msra.mxu0 %v137
    %155 = vmatprep.subr.bf16.mxu0 0
    %156 = vmatpush1.bf16.msra.mxu0 %v138
    %157 = vmatprep.subr.bf16.mxu0 0
    %158 = vmatpush1.bf16.msra.mxu0 %v139
    %159 = vmatprep.subr.bf16.mxu0 0
    %160 = vmatpush1.bf16.msra.mxu0 %v140
    %161 = vmatprep.subr.bf16.mxu0 0
    %162 = vmatpush1.bf16.msra.mxu0 %v141
    %163 = vmatprep.subr.bf16.mxu0 0
    %164 = vmatpush1.bf16.msra.mxu0 %v142
    %165 = vmatprep.subr.bf16.mxu0 0
    %166 = vmatpush1.bf16.msra.mxu0 %v143
    %167 = vmatprep.subr.bf16.mxu0 0
    %168 = vmatpush1.bf16.msra.mxu0 %v144
    %169 = vmatprep.subr.bf16.mxu0 0
    %170 = vmatpush1.bf16.msra.mxu0 0
    %171 = vmatprep.subr.bf16.mxu0 0
    %172 = vmatpush1.bf16.msra.mxu0 0
    %173 = vmatprep.subr.bf16.mxu0 0
    %174 = vmatpush1.bf16.msra.mxu0 0
    %175 = vmatprep.subr.bf16.mxu0 0
    %176 = vmatpush1.bf16.msra.mxu0 0
    %177 = vmatprep.subr.bf16.mxu0 0
    %178 = vmatpush1.bf16.msra.mxu0 0
    %179 = vmatprep.subr.bf16.mxu0 0
    %180 = vmatpush1.bf16.msra.mxu0 0
    %181 = vmatprep.subr.bf16.mxu0 0
    %182 = vmatpush1.bf16.msra.mxu0 0
    %183 = vmatprep.subr.bf16.mxu0 0
    %184 = vmatpush1.bf16.msra.mxu0 0
    %185 = vmatprep.mubr.bf16.mxu0 0
    %186 = vmatmul.mubr.bf16.gmra.mrb[0].mxu0 %v81
    %v187 = vpop.f32.mrb[0].mxu0
    %v188 = vadd.f32 %v103, %v187
    %v189 = vpop.f32.mrb[0].mxu0
    %v190 = vpop.f32.mrb[0].mxu0
    %v191 = vpop.f32.mrb[0].mxu0
    %192 = vdwg.mxu0
    %v193 = vpack.c.bf16 %v188, %v188
    %v194 = vld [vmem:[#allocation7] sm:$0xf]
    %v195 = vld [vmem:[#allocation7 + $0x4] sm:$0xf]
    %v196 = vld [vmem:[#allocation7 + $0x8] sm:$0xf]
    %v197 = vld [vmem:[#allocation7 + $0xc] sm:$0xf]
    %v198 = vld [vmem:[#allocation7 + $0x10] sm:$0xf]
    %v199 = vld [vmem:[#allocation7 + $0x14] sm:$0xf]
    %v200 = vld [vmem:[#allocation7 + $0x18] sm:$0xf]
    %v201 = vld [vmem:[#allocation7 + $0x1c] sm:$0xf]
    %v202 = vld [vmem:[#allocation7 + $0x20] sm:$0xf]
    %v203 = vld [vmem:[#allocation7 + $0x24] sm:$0xf]
    %v204 = vld [vmem:[#allocation7 + $0x28] sm:$0xf]
    %v205 = vld [vmem:[#allocation7 + $0x2c] sm:$0xf]
    %v206 = vld [vmem:[#allocation7 + $0x30] sm:$0xf]
    %v207 = vld [vmem:[#allocation7 + $0x34] sm:$0xf]
    %v208 = vld [vmem:[#allocation7 + $0x38] sm:$0xf]
    %v209 = vld [vmem:[#allocation7 + $0x3c] sm:$0xf]
    %v210 = vld [vmem:[%s4] sm:$0x1]
    %v212 = vlaneseq
    %v213 = vshrl.u32 %v212, 7
    %v214 = vsub.s32 0, %v213
    %v215 = vrot.slane %v210, %v214
    %v233 = vunpack.c.l.b16 %v194
    %v234 = vunpack.c.l.b16 %v195
    %v235 = vunpack.c.l.b16 %v196
    %v236 = vunpack.c.l.b16 %v197
    %v237 = vunpack.c.l.b16 %v198
    %v238 = vunpack.c.l.b16 %v199
    %v239 = vunpack.c.l.b16 %v200
    %v240 = vunpack.c.l.b16 %v201
    %v241 = vunpack.c.l.b16 %v202
    %v242 = vunpack.c.l.b16 %v203
    %v243 = vunpack.c.l.b16 %v204
    %v244 = vunpack.c.l.b16 %v205
    %v245 = vunpack.c.l.b16 %v206
    %v246 = vunpack.c.l.b16 %v207
    %v247 = vunpack.c.l.b16 %v208
    %v248 = vunpack.c.l.b16 %v209
    %v249 = vpack.c.b16 %v234, %v233
    %v250 = vpack.c.b16 %v236, %v235
    %v251 = vpack.c.b16 %v238, %v237
    %v252 = vpack.c.b16 %v240, %v239
    %v253 = vpack.c.b16 %v242, %v241
    %v254 = vpack.c.b16 %v244, %v243
    %v255 = vpack.c.b16 %v246, %v245
    %v256 = vpack.c.b16 %v248, %v247
    %265 = vmatprep.subr.bf16.mxu0 0
    %266 = vmatpush1.bf16.msra.mxu0 %v249
    %267 = vmatprep.subr.bf16.mxu0 0
    %268 = vmatpush1.bf16.msra.mxu0 %v250
    %269 = vmatprep.subr.bf16.mxu0 0
    %270 = vmatpush1.bf16.msra.mxu0 %v251
    %271 = vmatprep.subr.bf16.mxu0 0
    %272 = vmatpush1.bf16.msra.mxu0 %v252
    %273 = vmatprep.subr.bf16.mxu0 0
    %274 = vmatpush1.bf16.msra.mxu0 %v253
    %275 = vmatprep.subr.bf16.mxu0 0
    %276 = vmatpush1.bf16.msra.mxu0 %v254
    %277 = vmatprep.subr.bf16.mxu0 0
    %278 = vmatpush1.bf16.msra.mxu0 %v255
    %279 = vmatprep.subr.bf16.mxu0 0
    %280 = vmatpush1.bf16.msra.mxu0 %v256
    %281 = vmatprep.subr.bf16.mxu0 0
    %282 = vmatpush1.bf16.msra.mxu0 0
    %283 = vmatprep.subr.bf16.mxu0 0
    %284 = vmatpush1.bf16.msra.mxu0 0
    %285 = vmatprep.subr.bf16.mxu0 0
    %286 = vmatpush1.bf16.msra.mxu0 0
    %287 = vmatprep.subr.bf16.mxu0 0
    %288 = vmatpush1.bf16.msra.mxu0 0
    %289 = vmatprep.subr.bf16.mxu0 0
    %290 = vmatpush1.bf16.msra.mxu0 0
    %291 = vmatprep.subr.bf16.mxu0 0
    %292 = vmatpush1.bf16.msra.mxu0 0
    %293 = vmatprep.subr.bf16.mxu0 0
    %294 = vmatpush1.bf16.msra.mxu0 0
    %295 = vmatprep.subr.bf16.mxu0 0
    %296 = vmatpush1.bf16.msra.mxu0 0
    %297 = vmatprep.mubr.bf16.mxu0 0
    %298 = vmatmul.mubr.bf16.gmra.mrb[0].mxu0 %v193
    %v299 = vpop.f32.mrb[0].mxu0
    %v300 = vadd.f32 %v215, %v299
    %v301 = vpop.f32.mrb[0].mxu0
    %v302 = vpop.f32.mrb[0].mxu0
    %v303 = vpop.f32.mrb[0].mxu0
    %304 = vdwg.mxu0
    %v305 = vmax.f32 %v300, 0.0
    %v306 = vpack.c.bf16 %v305, %v305
    %s307 = scalar_lea.vmem [#allocation7], 64
    %v308 = vld [vmem:[%s307] sm:$0xf]
    %v309 = vld [vmem:[%s307 + $0x4] sm:$0xf]
    %v310 = vld [vmem:[%s307 + $0x8] sm:$0xf]
    %v311 = vld [vmem:[%s307 + $0xc] sm:$0xf]
    %v312 = vld [vmem:[%s307 + $0x10] sm:$0xf]
    %v313 = vld [vmem:[%s307 + $0x14] sm:$0xf]
    %v314 = vld [vmem:[%s307 + $0x18] sm:$0xf]
    %v315 = vld [vmem:[%s307 + $0x1c] sm:$0xf]
    %v316 = vld [vmem:[%s307 + $0x20] sm:$0xf]
    %v317 = vld [vmem:[%s307 + $0x24] sm:$0xf]
    %v318 = vld [vmem:[%s307 + $0x28] sm:$0xf]
    %v319 = vld [vmem:[%s307 + $0x2c] sm:$0xf]
    %v320 = vld [vmem:[%s307 + $0x30] sm:$0xf]
    %v321 = vld [vmem:[%s307 + $0x34] sm:$0xf]
    %v322 = vld [vmem:[%s307 + $0x38] sm:$0xf]
    %v323 = vld [vmem:[%s307 + $0x3c] sm:$0xf]
    %s324 = scalar_lea.vmem %s4, 1
    %v325 = vld [vmem:[%s324] sm:$0x1]
    %v327 = vlaneseq
    %v328 = vshrl.u32 %v327, 7
    %v329 = vsub.s32 0, %v328
    %v330 = vrot.slane %v325, %v329
    %v348 = vunpack.c.l.b16 %v308
    %v349 = vunpack.c.l.b16 %v309
    %v350 = vunpack.c.l.b16 %v310
    %v351 = vunpack.c.l.b16 %v311
    %v352 = vunpack.c.l.b16 %v312
    %v353 = vunpack.c.l.b16 %v313
    %v354 = vunpack.c.l.b16 %v314
    %v355 = vunpack.c.l.b16 %v315
    %v356 = vunpack.c.l.b16 %v316
    %v357 = vunpack.c.l.b16 %v317
    %v358 = vunpack.c.l.b16 %v318
    %v359 = vunpack.c.l.b16 %v319
    %v360 = vunpack.c.l.b16 %v320
    %v361 = vunpack.c.l.b16 %v321
    %v362 = vunpack.c.l.b16 %v322
    %v363 = vunpack.c.l.b16 %v323
    %v364 = vpack.c.b16 %v349, %v348
    %v365 = vpack.c.b16 %v351, %v350
    %v366 = vpack.c.b16 %v353, %v352
    %v367 = vpack.c.b16 %v355, %v354
    %v368 = vpack.c.b16 %v357, %v356
    %v369 = vpack.c.b16 %v359, %v358
    %v370 = vpack.c.b16 %v361, %v360
    %v371 = vpack.c.b16 %v363, %v362
    %380 = vmatprep.subr.bf16.mxu0 0
    %381 = vmatpush1.bf16.msra.mxu0 %v364
    %382 = vmatprep.subr.bf16.mxu0 0
    %383 = vmatpush1.bf16.msra.mxu0 %v365
    %384 = vmatprep.subr.bf16.mxu0 0
    %385 = vmatpush1.bf16.msra.mxu0 %v366
    %386 = vmatprep.subr.bf16.mxu0 0
    %387 = vmatpush1.bf16.msra.mxu0 %v367
    %388 = vmatprep.subr.bf16.mxu0 0
    %389 = vmatpush1.bf16.msra.mxu0 %v368
    %390 = vmatprep.subr.bf16.mxu0 0
    %391 = vmatpush1.bf16.msra.mxu0 %v369
    %392 = vmatprep.subr.bf16.mxu0 0
    %393 = vmatpush1.bf16.msra.mxu0 %v370
    %394 = vmatprep.subr.bf16.mxu0 0
    %395 = vmatpush1.bf16.msra.mxu0 %v371
    %396 = vmatprep.subr.bf16.mxu0 0
    %397 = vmatpush1.bf16.msra.mxu0 0
    %398 = vmatprep.subr.bf16.mxu0 0
    %399 = vmatpush1.bf16.msra.mxu0 0
    %400 = vmatprep.subr.bf16.mxu0 0
    %401 = vmatpush1.bf16.msra.mxu0 0
    %402 = vmatprep.subr.bf16.mxu0 0
    %403 = vmatpush1.bf16.msra.mxu0 0
    %404 = vmatprep.subr.bf16.mxu0 0
    %405 = vmatpush1.bf16.msra.mxu0 0
    %406 = vmatprep.subr.bf16.mxu0 0
    %407 = vmatpush1.bf16.msra.mxu0 0
    %408 = vmatprep.subr.bf16.mxu0 0
    %409 = vmatpush1.bf16.msra.mxu0 0
    %410 = vmatprep.subr.bf16.mxu0 0
    %411 = vmatpush1.bf16.msra.mxu0 0
    %412 = vmatprep.mubr.bf16.mxu0 0
    %413 = vmatmul.mubr.bf16.gmra.mrb[0].mxu0 %v306
    %v414 = vpop.f32.mrb[0].mxu0
    %v415 = vadd.f32 %v330, %v414
    %v416 = vpop.f32.mrb[0].mxu0
    %v417 = vpop.f32.mrb[0].mxu0
    %v418 = vpop.f32.mrb[0].mxu0
    %419 = vdwg.mxu0
    %v420 = vmax.f32 %v415, 0.0
    %v421 = vpack.c.bf16 %v420, %v420
    %v422 = vld [vmem:[#allocation8] sm:$0xf]
    %v423 = vld [vmem:[#allocation8 + $0x4] sm:$0xf]
    %v424 = vld [vmem:[#allocation8 + $0x8] sm:$0xf]
    %v425 = vld [vmem:[#allocation8 + $0xc] sm:$0xf]
    %v426 = vld [vmem:[#allocation8 + $0x10] sm:$0xf]
    %v427 = vld [vmem:[#allocation8 + $0x14] sm:$0xf]
    %v428 = vld [vmem:[#allocation8 + $0x18] sm:$0xf]
    %v429 = vld [vmem:[#allocation8 + $0x1c] sm:$0xf]
    %v430 = vld [vmem:[#allocation8 + $0x20] sm:$0xf]
    %v431 = vld [vmem:[#allocation8 + $0x24] sm:$0xf]
    %v432 = vld [vmem:[#allocation8 + $0x28] sm:$0xf]
    %v433 = vld [vmem:[#allocation8 + $0x2c] sm:$0xf]
    %v434 = vld [vmem:[#allocation8 + $0x30] sm:$0xf]
    %v435 = vld [vmem:[#allocation8 + $0x34] sm:$0xf]
    %v436 = vld [vmem:[#allocation8 + $0x38] sm:$0xf]
    %v437 = vld [vmem:[#allocation8 + $0x3c] sm:$0xf]
    %v438 = vld [vmem:[%s6] sm:$0x1]
    %v440 = vlaneseq
    %v441 = vshrl.u32 %v440, 7
    %v442 = vsub.s32 0, %v441
    %v443 = vrot.slane %v438, %v442
    %v461 = vunpack.c.l.b16 %v422
    %v462 = vunpack.c.l.b16 %v423
    %v463 = vunpack.c.l.b16 %v424
    %v464 = vunpack.c.l.b16 %v425
    %v465 = vunpack.c.l.b16 %v426
    %v466 = vunpack.c.l.b16 %v427
    %v467 = vunpack.c.l.b16 %v428
    %v468 = vunpack.c.l.b16 %v429
    %v469 = vunpack.c.l.b16 %v430
    %v470 = vunpack.c.l.b16 %v431
    %v471 = vunpack.c.l.b16 %v432
    %v472 = vunpack.c.l.b16 %v433
    %v473 = vunpack.c.l.b16 %v434
    %v474 = vunpack.c.l.b16 %v435
    %v475 = vunpack.c.l.b16 %v436
    %v476 = vunpack.c.l.b16 %v437
    %v477 = vpack.c.b16 %v462, %v461
    %v478 = vpack.c.b16 %v464, %v463
    %v479 = vpack.c.b16 %v466, %v465
    %v480 = vpack.c.b16 %v468, %v467
    %v481 = vpack.c.b16 %v470, %v469
    %v482 = vpack.c.b16 %v472, %v471
    %v483 = vpack.c.b16 %v474, %v473
    %v484 = vpack.c.b16 %v476, %v475
    %493 = vmatprep.subr.bf16.mxu0 0
    %494 = vmatpush1.bf16.msra.mxu0 %v477
    %495 = vmatprep.subr.bf16.mxu0 0
    %496 = vmatpush1.bf16.msra.mxu0 %v478
    %497 = vmatprep.subr.bf16.mxu0 0
    %498 = vmatpush1.bf16.msra.mxu0 %v479
    %499 = vmatprep.subr.bf16.mxu0 0
    %500 = vmatpush1.bf16.msra.mxu0 %v480
    %501 = vmatprep.subr.bf16.mxu0 0
    %502 = vmatpush1.bf16.msra.mxu0 %v481
    %503 = vmatprep.subr.bf16.mxu0 0
    %504 = vmatpush1.bf16.msra.mxu0 %v482
    %505 = vmatprep.subr.bf16.mxu0 0
    %506 = vmatpush1.bf16.msra.mxu0 %v483
    %507 = vmatprep.subr.bf16.mxu0 0
    %508 = vmatpush1.bf16.msra.mxu0 %v484
    %509 = vmatprep.subr.bf16.mxu0 0
    %510 = vmatpush1.bf16.msra.mxu0 0
    %511 = vmatprep.subr.bf16.mxu0 0
    %512 = vmatpush1.bf16.msra.mxu0 0
    %513 = vmatprep.subr.bf16.mxu0 0
    %514 = vmatpush1.bf16.msra.mxu0 0
    %515 = vmatprep.subr.bf16.mxu0 0
    %516 = vmatpush1.bf16.msra.mxu0 0
    %517 = vmatprep.subr.bf16.mxu0 0
    %518 = vmatpush1.bf16.msra.mxu0 0
    %519 = vmatprep.subr.bf16.mxu0 0
    %520 = vmatpush1.bf16.msra.mxu0 0
    %521 = vmatprep.subr.bf16.mxu0 0
    %522 = vmatpush1.bf16.msra.mxu0 0
    %523 = vmatprep.subr.bf16.mxu0 0
    %524 = vmatpush1.bf16.msra.mxu0 0
    %525 = vmatprep.mubr.bf16.mxu0 0
    %526 = vmatmul.mubr.bf16.gmra.mrb[0].mxu0 %v421
    %v527 = vpop.f32.mrb[0].mxu0
    %v528 = vadd.f32 %v443, %v527
    %v529 = vpop.f32.mrb[0].mxu0
    %v530 = vpop.f32.mrb[0].mxu0
    %v531 = vpop.f32.mrb[0].mxu0
    %532 = vdwg.mxu0
    %533 = vst [vmem:[#allocation10] sm:$0xff] %v528
    // Predicated region
    $region46: #{tpu_custom_call.1} parent=1 // pred_check
      _
    $region47: #{tpu_custom_call.1} parent=1 // pred_check_branch
      %535 = sbr.rel (0) target = $region49
    $region48: #{tpu_custom_call.1} parent=1 // pred_region
      %s537 = ssub.s32 128, 128
      %538 = vsyncadd [#allocation4], %s537
      %s540 = sshll.u32 [#allocation10], 4
      %s541 = int_to_ptr.vmem [resolvable:$true] %s540
      %543 = dma.vmem_to_hbm [thread:$0]  %s541, 128, %s7, [#allocation4]
    $region49: #{tpu_custom_call.1} parent=1 // pred_fallthru
      _
    // Predicated region
    $region50: #{tpu_custom_call.1} parent=1 // pred_check
      _
    $region51: #{tpu_custom_call.1} parent=1 // pred_check_branch
      %545 = sbr.rel (0) target = $region53
    $region52: #{tpu_custom_call.1} parent=1 // pred_region
      %546 = dma.done [#allocation4], 128
    $region53: #{tpu_custom_call.1} parent=1 // pred_fallthru
      _
    %547 = vsyncpa [#allocation3], 1
    %548 = vsyncpa [#allocation6], 1
    %549 = vsyncpa [#allocation9], 1
    %550 = vsyncpa [#allocation4], 1

</llo_original>
